<compile_context>
chip_gen: v7x
topology: tpu7x:2x2x1
jax: 0.10.0
libtpu: 0.0.40
codegen_flags: <defaults>
</compile_context>

<pallas_src>
import jax
import jax.numpy as jnp
import numpy as np
from jax.experimental import pallas as pl
from jax.experimental.pallas import tpu as pltpu

KSIZE = 5
PAD = 2

# Interior column offset inside the padded VMEM scratch: lane-aligned (128)
# so the full H x W interior copy is an unmasked store.  The two left-halo
# columns live at [COL_0, COL_I); columns < COL_0 are never touched.
COL_I = 128
COL_0 = COL_I - PAD

# Fixed high-pass ("KV") filter from the PyTorch module (reference only; the
# kernel uses its rank-2 factorization baked in as compile-time scalars).
KV = np.array(
    [[-1.0, 2.0, -2.0, 2.0, -1.0],
     [2.0, -6.0, 8.0, -6.0, 2.0],
     [-2.0, 8.0, -12.0, 8.0, -2.0],
     [2.0, -6.0, 8.0, -6.0, 2.0],
     [-1.0, 2.0, -2.0, 2.0, -1.0]],
    dtype=np.float32,
)
# Rank-2 factorization check (KV = u0 (x) r0 + u1 (x) r1):
_R0 = np.array([-1.0, 2.0, -2.0, 2.0, -1.0], np.float32)
_R1 = np.array([2.0, -6.0, 8.0, -6.0, 2.0], np.float32)
_U0 = np.array([1.0, 0.0, -2.0, 0.0, 1.0], np.float32)
_U1 = np.array([0.0, 1.0, -2.0, 1.0, 0.0], np.float32)
assert np.array_equal(np.outer(_U0, _R0) + np.outer(_U1, _R1), KV)


def _make_hpf_kernel(b_tile, H, W):
    Hp = H + 2 * PAD          # padded height (rows [PAD, PAD+H) = interior)
    Wp = W + 2 * PAD          # width of the read window [COL_0, COL_0+Wp)

    def kernel(x_ref, o_ref, xp_ref, h0_ref, h1_ref):
        # x_ref : (bt, H, W)            input block (unpadded)
        # o_ref : (bt, H, W)            output block
        # xp_ref: (bt, Hp, COL_I+W+PAD) padded input scratch (interior at
        #                               rows [PAD,PAD+H), cols [COL_I,COL_I+W))
        # h0_ref, h1_ref: (bt, Hp, W)   horizontal-pass intermediates
        f32 = jnp.float32

        # ---- zero only the 2-wide halo strips (scratch is reused per core,
        # so the strips must be (re)zeroed; the interior never touches them).
        zrow = jnp.zeros((b_tile, PAD, Wp), f32)
        xp_ref[:, 0:PAD, COL_0:COL_0 + Wp] = zrow                    # top
        xp_ref[:, PAD + H:PAD + H + PAD, COL_0:COL_0 + Wp] = zrow    # bottom
        zcol = jnp.zeros((b_tile, H, PAD), f32)
        xp_ref[:, PAD:PAD + H, COL_0:COL_0 + PAD] = zcol             # left
        xp_ref[:, PAD:PAD + H, COL_I + W:COL_I + W + PAD] = zcol     # right

        # ---- interior copy: lane-aligned store at column COL_I (=128).
        xp_ref[:, PAD:PAD + H, COL_I:COL_I + W] = x_ref[...]

        # ---- horizontal pass: the 5 lane-shifted reads are shared by both
        # row filters r0/r1 via symmetric pre-sums (r0, r1 are symmetric).
        s0 = xp_ref[:, :, COL_0 + 0:COL_0 + 0 + W]
        s1 = xp_ref[:, :, COL_0 + 1:COL_0 + 1 + W]
        s2 = xp_ref[:, :, COL_0 + 2:COL_0 + 2 + W]   # lane-aligned (col 128)
        s3 = xp_ref[:, :, COL_0 + 3:COL_0 + 3 + W]
        s4 = xp_ref[:, :, COL_0 + 4:COL_0 + 4 + W]
        e = s0 + s4
        o = s1 + s3
        # r0 . s = -e + 2*o - 2*s2 ;  r1 . s = 2*e - 6*o + 8*s2
        h0_ref[...] = 2.0 * o - e - 2.0 * s2
        h1_ref[...] = 2.0 * e - 6.0 * o + 8.0 * s2

        # ---- vertical combine: u0 = [1,0,-2,0,1], u1 = [0,1,-2,1,0]
        a = h0_ref[:, 0:H, :] + h0_ref[:, 4:4 + H, :]
        b = h1_ref[:, 1:1 + H, :] + h1_ref[:, 3:3 + H, :]
        c = h0_ref[:, 2:2 + H, :] + h1_ref[:, 2:2 + H, :]
        o_ref[...] = (a + b - 2.0 * c).astype(o_ref.dtype)

    return kernel


def _vmem_capacity_bytes():
    try:
        return int(pltpu.get_tpu_info().vmem_capacity_bytes)
    except Exception:
        return 64 * 1024 * 1024  # conservative: assume v7x (64 MiB / TC)


def _choose_batch_tile(N, H, W):
    """Pick images per grid step and the VMEM limit, per-chip-generation."""
    Hp = H + 2 * PAD
    xp_w = COL_I + W + PAD
    cap = _vmem_capacity_bytes()
    # v7x (64 MiB/TC) -> 48 MiB limit; v5e/v6e (128 MiB) -> 96 MiB limit.
    vmem_limit = min((cap * 3) // 4, 96 * 1024 * 1024)
    budget = vmem_limit // 2          # headroom for Mosaic temporaries/spill
    per_b = 4 * (2 * H * W            # double-buffered input block
                 + 2 * H * W          # double-buffered output block
                 + Hp * xp_w          # padded scratch
                 + 2 * Hp * W         # h0/h1 intermediates
                 + 3 * Hp * W)        # live e/o/s2-style temporaries
    bt = max(1, min(N, 32, budget // max(per_b, 1)))
    # Keep at least 2 parallel grid steps when N > 1 (feed both v7x TCs and
    # keep the pipeline overlapped).
    while bt > 1 and pl.cdiv(N, bt) < 2:
        bt = max(1, bt // 2)
    return bt, vmem_limit


def hpf(x):
    """x: (N, 1, H, W) float32 -> (N, 1, H, W) float32 (== HPF.forward)."""
    N, C, H, W = x.shape
    assert C == 1
    x2 = x[:, 0, :, :]  # (N, H, W)

    bt, vmem_limit = _choose_batch_tile(N, H, W)
    n_pad = (-N) % bt
    if n_pad:
        x2 = jnp.pad(x2, ((0, n_pad), (0, 0), (0, 0)))  # zero batch padding
    Nb = x2.shape[0]
    Hp = H + 2 * PAD
    xp_w = COL_I + W + PAD

    out = pl.pallas_call(
        _make_hpf_kernel(bt, H, W),
        out_shape=jax.ShapeDtypeStruct((Nb, H, W), jnp.float32),
        grid_spec=pltpu.PrefetchScalarGridSpec(
            num_scalar_prefetch=0,
            grid=(Nb // bt,),
            in_specs=[pl.BlockSpec((bt, H, W), lambda b: (b, 0, 0))],
            out_specs=pl.BlockSpec((bt, H, W), lambda b: (b, 0, 0)),
            scratch_shapes=[
                pltpu.VMEM((bt, Hp, xp_w), jnp.float32),   # padded input
                pltpu.VMEM((bt, Hp, W), jnp.float32),      # h0
                pltpu.VMEM((bt, Hp, W), jnp.float32),      # h1
            ],
        ),
        compiler_params=pltpu.CompilerParams(
            dimension_semantics=("parallel",),
            vmem_limit_bytes=vmem_limit,
        ),
    )(x2)

    return out[:N].reshape(N, 1, H, W)


def _reference(x):
    """Pure-JAX reference: Conv2d(1,1,5,1,2,bias=False) with the fixed KV filter."""
    w = jnp.asarray(KV).reshape(1, 1, KSIZE, KSIZE)
    return jax.lax.conv_general_dilated(
        x, w, window_strides=(1, 1), padding=((PAD, PAD), (PAD, PAD)),
        dimension_numbers=("NCHW", "OIHW", "NCHW"))


if __name__ == "__main__":
    key = jax.random.PRNGKey(0)
    # Small input consistent with the module: batch=2, 1 channel, 16x16 spatial.
    x = jax.random.normal(key, (2, 1, 16, 16), jnp.float32)

    out = jax.block_until_ready(hpf(x))
    ref = jax.block_until_ready(_reference(x))

    assert out.shape == (2, 1, 16, 16), out.shape
    np.testing.assert_allclose(np.asarray(out), np.asarray(ref),
                               rtol=1e-5, atol=1e-4)
    print("KERNEL_OK")
</pallas_src>

<mosaic_0001>
module attributes {stable_mosaic.version = 11 : i64} {
  func.func @kernel(%arg0: i32, %arg1: memref<1x16x16xf32, #tpu.memory_space<vmem>>, %arg2: memref<1x16x16xf32, #tpu.memory_space<vmem>>, %arg3: memref<1x20x146xf32, #tpu.memory_space<vmem>>, %arg4: memref<1x20x16xf32, #tpu.memory_space<vmem>>, %arg5: memref<1x20x16xf32, #tpu.memory_space<vmem>>) attributes {dimension_semantics = [#tpu.dimension_semantics<parallel>], iteration_bounds = array<i64: 2>, scalar_prefetch = 0 : i64, scratch_operands = 3 : i64, tpu.core_type = #tpu.core_type<tc>, window_params = [{transform_indices = @transform_0, window_bounds = array<i64: 1, 16, 16>}, {transform_indices = @transform_1, window_bounds = array<i64: 1, 16, 16>}]} {
    %cst = arith.constant 0.000000e+00 : f32
    %0 = vector.broadcast %cst : f32 to vector<1x2x20xf32>
    %c0 = arith.constant 0 : index
    %c0_0 = arith.constant 0 : index
    %c126 = arith.constant 126 : index
    %1 = vector.load %arg3[%c0, %c0_0, %c126] : memref<1x20x146xf32, #tpu.memory_space<vmem>>, vector<1x2x20xf32>
    tpu.vector_store %arg3[%c0, %c0_0, %c126], %0 {strides = array<i32>} : memref<1x20x146xf32, #tpu.memory_space<vmem>>, vector<1x2x20xf32>,
    %c0_1 = arith.constant 0 : index
    %c18 = arith.constant 18 : index
    %c126_2 = arith.constant 126 : index
    %2 = vector.load %arg3[%c0_1, %c18, %c126_2] : memref<1x20x146xf32, #tpu.memory_space<vmem>>, vector<1x2x20xf32>
    tpu.vector_store %arg3[%c0_1, %c18, %c126_2], %0 {strides = array<i32>} : memref<1x20x146xf32, #tpu.memory_space<vmem>>, vector<1x2x20xf32>,
    %cst_3 = arith.constant 0.000000e+00 : f32
    %3 = vector.broadcast %cst_3 : f32 to vector<1x16x2xf32>
    %c0_4 = arith.constant 0 : index
    %c2 = arith.constant 2 : index
    %c126_5 = arith.constant 126 : index
    %4 = vector.load %arg3[%c0_4, %c2, %c126_5] : memref<1x20x146xf32, #tpu.memory_space<vmem>>, vector<1x16x2xf32>
    tpu.vector_store %arg3[%c0_4, %c2, %c126_5], %3 {strides = array<i32>} : memref<1x20x146xf32, #tpu.memory_space<vmem>>, vector<1x16x2xf32>,
    %c0_6 = arith.constant 0 : index
    %c2_7 = arith.constant 2 : index
    %c144 = arith.constant 144 : index
    %5 = vector.load %arg3[%c0_6, %c2_7, %c144] : memref<1x20x146xf32, #tpu.memory_space<vmem>>, vector<1x16x2xf32>
    tpu.vector_store %arg3[%c0_6, %c2_7, %c144], %3 {strides = array<i32>} : memref<1x20x146xf32, #tpu.memory_space<vmem>>, vector<1x16x2xf32>,
    %c0_8 = arith.constant 0 : index
    %c0_9 = arith.constant 0 : index
    %c0_10 = arith.constant 0 : index
    %6 = vector.load %arg1[%c0_8, %c0_9, %c0_10] : memref<1x16x16xf32, #tpu.memory_space<vmem>>, vector<1x16x16xf32>
    %c0_11 = arith.constant 0 : index
    %c2_12 = arith.constant 2 : index
    %c128 = arith.constant 128 : index
    %7 = vector.load %arg3[%c0_11, %c2_12, %c128] : memref<1x20x146xf32, #tpu.memory_space<vmem>>, vector<1x16x16xf32>
    tpu.vector_store %arg3[%c0_11, %c2_12, %c128], %6 {strides = array<i32>} : memref<1x20x146xf32, #tpu.memory_space<vmem>>, vector<1x16x16xf32>,
    %c0_13 = arith.constant 0 : index
    %c0_14 = arith.constant 0 : index
    %c126_15 = arith.constant 126 : index
    %8 = vector.load %arg3[%c0_13, %c0_14, %c126_15] : memref<1x20x146xf32, #tpu.memory_space<vmem>>, vector<1x20x16xf32>
    %c0_16 = arith.constant 0 : index
    %c0_17 = arith.constant 0 : index
    %c127 = arith.constant 127 : index
    %9 = vector.load %arg3[%c0_16, %c0_17, %c127] : memref<1x20x146xf32, #tpu.memory_space<vmem>>, vector<1x20x16xf32>
    %c0_18 = arith.constant 0 : index
    %c0_19 = arith.constant 0 : index
    %c128_20 = arith.constant 128 : index
    %10 = vector.load %arg3[%c0_18, %c0_19, %c128_20] : memref<1x20x146xf32, #tpu.memory_space<vmem>>, vector<1x20x16xf32>
    %c0_21 = arith.constant 0 : index
    %c0_22 = arith.constant 0 : index
    %c129 = arith.constant 129 : index
    %11 = vector.load %arg3[%c0_21, %c0_22, %c129] : memref<1x20x146xf32, #tpu.memory_space<vmem>>, vector<1x20x16xf32>
    %c0_23 = arith.constant 0 : index
    %c0_24 = arith.constant 0 : index
    %c130 = arith.constant 130 : index
    %12 = vector.load %arg3[%c0_23, %c0_24, %c130] : memref<1x20x146xf32, #tpu.memory_space<vmem>>, vector<1x20x16xf32>
    %13 = arith.addf %8, %12 : vector<1x20x16xf32>
    %14 = arith.addf %9, %11 : vector<1x20x16xf32>
    %cst_25 = arith.constant 2.000000e+00 : f32
    %15 = vector.broadcast %cst_25 : f32 to vector<1x20x16xf32>
    %16 = arith.mulf %15, %14 : vector<1x20x16xf32>
    %17 = arith.subf %16, %13 : vector<1x20x16xf32>
    %cst_26 = arith.constant 2.000000e+00 : f32
    %18 = vector.broadcast %cst_26 : f32 to vector<1x20x16xf32>
    %19 = arith.mulf %18, %10 : vector<1x20x16xf32>
    %20 = arith.subf %17, %19 : vector<1x20x16xf32>
    %c0_27 = arith.constant 0 : index
    %c0_28 = arith.constant 0 : index
    %c0_29 = arith.constant 0 : index
    %21 = vector.load %arg4[%c0_27, %c0_28, %c0_29] : memref<1x20x16xf32, #tpu.memory_space<vmem>>, vector<1x20x16xf32>
    tpu.vector_store %arg4[%c0_27, %c0_28, %c0_29], %20 {strides = array<i32>} : memref<1x20x16xf32, #tpu.memory_space<vmem>>, vector<1x20x16xf32>,
    %cst_30 = arith.constant 2.000000e+00 : f32
    %22 = vector.broadcast %cst_30 : f32 to vector<1x20x16xf32>
    %23 = arith.mulf %22, %13 : vector<1x20x16xf32>
    %cst_31 = arith.constant 6.000000e+00 : f32
    %24 = vector.broadcast %cst_31 : f32 to vector<1x20x16xf32>
    %25 = arith.mulf %24, %14 : vector<1x20x16xf32>
    %26 = arith.subf %23, %25 : vector<1x20x16xf32>
    %cst_32 = arith.constant 8.000000e+00 : f32
    %27 = vector.broadcast %cst_32 : f32 to vector<1x20x16xf32>
    %28 = arith.mulf %27, %10 : vector<1x20x16xf32>
    %29 = arith.addf %26, %28 : vector<1x20x16xf32>
    %c0_33 = arith.constant 0 : index
    %c0_34 = arith.constant 0 : index
    %c0_35 = arith.constant 0 : index
    %30 = vector.load %arg5[%c0_33, %c0_34, %c0_35] : memref<1x20x16xf32, #tpu.memory_space<vmem>>, vector<1x20x16xf32>
    tpu.vector_store %arg5[%c0_33, %c0_34, %c0_35], %29 {strides = array<i32>} : memref<1x20x16xf32, #tpu.memory_space<vmem>>, vector<1x20x16xf32>,
    %c0_36 = arith.constant 0 : index
    %c0_37 = arith.constant 0 : index
    %c0_38 = arith.constant 0 : index
    %31 = vector.load %arg4[%c0_36, %c0_37, %c0_38] : memref<1x20x16xf32, #tpu.memory_space<vmem>>, vector<1x16x16xf32>
    %c0_39 = arith.constant 0 : index
    %c4 = arith.constant 4 : index
    %c0_40 = arith.constant 0 : index
    %32 = vector.load %arg4[%c0_39, %c4, %c0_40] : memref<1x20x16xf32, #tpu.memory_space<vmem>>, vector<1x16x16xf32>
    %33 = arith.addf %31, %32 : vector<1x16x16xf32>
    %c0_41 = arith.constant 0 : index
    %c1 = arith.constant 1 : index
    %c0_42 = arith.constant 0 : index
    %34 = vector.load %arg5[%c0_41, %c1, %c0_42] : memref<1x20x16xf32, #tpu.memory_space<vmem>>, vector<1x16x16xf32>
    %c0_43 = arith.constant 0 : index
    %c3 = arith.constant 3 : index
    %c0_44 = arith.constant 0 : index
    %35 = vector.load %arg5[%c0_43, %c3, %c0_44] : memref<1x20x16xf32, #tpu.memory_space<vmem>>, vector<1x16x16xf32>
    %36 = arith.addf %34, %35 : vector<1x16x16xf32>
    %c0_45 = arith.constant 0 : index
    %c2_46 = arith.constant 2 : index
    %c0_47 = arith.constant 0 : index
    %37 = vector.load %arg4[%c0_45, %c2_46, %c0_47] : memref<1x20x16xf32, #tpu.memory_space<vmem>>, vector<1x16x16xf32>
    %c0_48 = arith.constant 0 : index
    %c2_49 = arith.constant 2 : index
    %c0_50 = arith.constant 0 : index
    %38 = vector.load %arg5[%c0_48, %c2_49, %c0_50] : memref<1x20x16xf32, #tpu.memory_space<vmem>>, vector<1x16x16xf32>
    %39 = arith.addf %37, %38 : vector<1x16x16xf32>
    %40 = arith.addf %33, %36 : vector<1x16x16xf32>
    %cst_51 = arith.constant 2.000000e+00 : f32
    %41 = vector.broadcast %cst_51 : f32 to vector<1x16x16xf32>
    %42 = arith.mulf %41, %39 : vector<1x16x16xf32>
    %43 = arith.subf %40, %42 : vector<1x16x16xf32>
    %c0_52 = arith.constant 0 : index
    %c0_53 = arith.constant 0 : index
    %c0_54 = arith.constant 0 : index
    %44 = vector.load %arg2[%c0_52, %c0_53, %c0_54] : memref<1x16x16xf32, #tpu.memory_space<vmem>>, vector<1x16x16xf32>
    tpu.vector_store %arg2[%c0_52, %c0_53, %c0_54], %43 {strides = array<i32>} : memref<1x16x16xf32, #tpu.memory_space<vmem>>, vector<1x16x16xf32>,
    return
  }
  func.func @transform_0(%arg0: i32) -> (i32, i32, i32) {
    %c0_i32 = arith.constant 0 : i32
    %c0_i32_0 = arith.constant 0 : i32
    %c0_i32_1 = arith.constant 0 : i32
    return %arg0, %c0_i32, %c0_i32_0 : i32, i32, i32
  }
  func.func @transform_1(%arg0: i32) -> (i32, i32, i32) {
    %c0_i32 = arith.constant 0 : i32
    %c0_i32_0 = arith.constant 0 : i32
    %c0_i32_1 = arith.constant 0 : i32
    return %arg0, %c0_i32, %c0_i32_0 : i32, i32, i32
  }
}

</mosaic_0001>

<llo_original>
// kernel: tpu_custom_call.1
$region0: #{tpu_custom_call.1}
  #allocation0 [shape = 'u32[]', space=smem, size = 0x4, offset = 0x4, fixed_abs, tag = 'smem constant byte address 0x4 - core index']
  #allocation1 [shape = 'u32[144,128]{1,0:T(1,128)}', space=vmem, size = 0x12000, scoped, tag = 'internal scratch']
  #allocation2 [shape = 'f32[1,20,146]{2,1,0:T(8,128)}', space=vmem, size = 0x6000, scoped, tag = 'scratch operand']
  #allocation3 [shape = 'f32[1,20,16]{2,1,0:T(8,128)}', space=vmem, size = 0x3000, scoped, tag = 'scratch operand']
  #allocation4 [shape = 'f32[1,20,16]{2,1,0:T(8,128)}', space=vmem, size = 0x3000, scoped, tag = 'scratch operand']
  %s0 = inlined_call_operand.hbm [shape: f32[2,16,16], index: 0, kind: input, shape index: {}]
  %s1 = inlined_call_operand.hbm [shape: f32[2,16,16], index: 1, kind: output, shape index: {}]
  %s2 = sld [smem:[#allocation0]]
  $region41: #{tpu_custom_call.1} parent=0
    _
  %s4 = ssub.s32 1, %s2
  %s5 = scalar_select 0, %s4, %s2
  $region1: #{tpu_custom_call.1} parent=0
    #allocation5 [shape = 'u8[16384]{0}', space=vmem, size = 0x4000, scoped, tag = 'input window, operand 0']
    #allocation6 [shape = 's32[2]{0}', space=sflag, size = 0x8, scoped, tag = 'scoped memory for tpu_custom_call.1']
    #allocation7 [shape = 's32[2]{0}', space=sflag, size = 0x8, scoped, tag = 'scoped memory for tpu_custom_call.1']
    #allocation8 [shape = 'u8[16384]{0}', space=vmem, size = 0x4000, scoped, tag = 'output window, operand 0']
    %6 = vsyncpa [#allocation6], 0
    %s7 = scalar_lea.sflag [#allocation6], 1
    %8 = vsyncpa %s7, 0
    %9 = vsyncpa [#allocation7], 0
    %s10 = scalar_lea.sflag [#allocation7], 1
    %11 = vsyncpa %s10, 0
    loop: start=0, step=1, limit=4
    $region2: #{tpu_custom_call.1} parent=1 // loop_pre_header
      _
    $region3: #{tpu_custom_call.1} parent=1 // loop_header
      %s13 = sphi 0, %s17
      %p14 = scmp.ge.s32.totalorder %s13, 4
      %s23 = sphi 0, %s25
      %s26 = sphi 0, %s23
      %s27 = sphi 0, %s26
      %s43 = sphi 0, %s27
      %s49 = sphi 0, %s51
      %s52 = sphi 0, %s49
      %s53 = sphi 0, %s52
      %s69 = sphi 0, %s53
    $region4: #{tpu_custom_call.1} parent=1 // loop_header_branch
      %16 = sbr.rel (%p14) target = $region8
    $region5: #{tpu_custom_call.1} parent=1 // loop_body
      %s18 = ssub.s32 %s13, 1
      %s19 = ssub.s32 %s13, 2
      %s20 = sadd.s32 %s13, 1
      %s21 = ssub.s32 %s13, %s20
      %p22 = scmp.eq.s32.totalorder %s21, 0
      %s24 = sadd.s32 %s23, 1
      %s25 = scalar_select %p22, %s23, %s24
      %p28 = pneg %p22
      %p29 = scmp.eq.s32.totalorder %s13, 1
      %p30 = por %p28, %p29
      %p31 = scmp.ne.s32.totalorder %s23, %s26
      %p32 = scmp.eq.s32.totalorder %s13, 0
      %p33 = por %p31, %p32
      %p34 = scmp.ne.s32.totalorder %s23, %s26
      %p35 = scmp.eq.s32.totalorder %s18, 1
      %p36 = por %p34, %p35
      %p37 = scmp.ne.s32.totalorder %s26, %s27
      %p38 = scmp.eq.s32.totalorder %s18, 0
      %p39 = por %p37, %p38
      %p40 = scmp.ne.s32.totalorder %s26, %s27
      %p41 = scmp.eq.s32.totalorder %s19, 1
      %p42 = por %p40, %p41
      %p44 = scmp.ne.s32.totalorder %s27, %s43
      %p45 = scmp.eq.s32.totalorder %s19, 0
      %p46 = por %p44, %p45
      %s47 = ssub.s32 %s13, %s20
      %p48 = scmp.eq.s32.totalorder %s47, 0
      %s50 = sadd.s32 %s49, 1
      %s51 = scalar_select %p48, %s49, %s50
      %p54 = pneg %p48
      %p55 = scmp.eq.s32.totalorder %s13, 1
      %p56 = por %p54, %p55
      %p57 = scmp.ne.s32.totalorder %s49, %s52
      %p58 = scmp.eq.s32.totalorder %s13, 0
      %p59 = por %p57, %p58
      %p60 = scmp.ne.s32.totalorder %s49, %s52
      %p61 = scmp.eq.s32.totalorder %s18, 1
      %p62 = por %p60, %p61
      %p63 = scmp.ne.s32.totalorder %s52, %s53
      %p64 = scmp.eq.s32.totalorder %s18, 0
      %p65 = por %p63, %p64
      %p66 = scmp.ne.s32.totalorder %s52, %s53
      %p67 = scmp.eq.s32.totalorder %s19, 1
      %p68 = por %p66, %p67
      %p70 = scmp.ne.s32.totalorder %s53, %s69
      %p71 = scmp.eq.s32.totalorder %s19, 0
      %p72 = por %p70, %p71
      %p73 = scmp.le.s32.totalorder 1, %s13
      %p74 = scmp.lt.s32.totalorder %s13, 3
      %p75 = pnand %p73, %p74
      %p76 = pneg %p75
      // Predicated region
      $region9: #{tpu_custom_call.1} parent=5 // pred_check
        _
      $region10: #{tpu_custom_call.1} parent=5 // pred_check_branch
        %78 = sbr.rel (%p75) target = $region12
      $region11: #{tpu_custom_call.1} parent=5 // pred_region
        %s79 = ssub.s32 %s13, 1
      $region12: #{tpu_custom_call.1} parent=5 // pred_fallthru
        _
      %p80 = scmp.lt.s32.totalorder %s13, 2
      // Predicated region
      $region13: #{tpu_custom_call.1} parent=5 // pred_check
        %p81 = pneg %p80
      $region14: #{tpu_custom_call.1} parent=5 // pred_check_branch
        %83 = sbr.rel (%p81) target = $region16
      $region15: #{tpu_custom_call.1} parent=5 // pred_region
        // Predicated region
        $region17: #{tpu_custom_call.1} parent=15 // pred_check
          %p84 = pneg %p33
        $region18: #{tpu_custom_call.1} parent=15 // pred_check_branch
          %86 = sbr.rel (%p84) target = $region20
        $region19: #{tpu_custom_call.1} parent=15 // pred_region
          %s87 = sand.u32 %s23, 1
          %s88 = scalar_lea.sflag [#allocation6], %s87
          %s89 = sand.u32 %s23, 1
          %s90 = smul.addr %s89, 16
          %s91 = scalar_lea.vmem [#allocation5], %s90
          %s93 = ssub.s32 256, 256
          %94 = vsyncadd %s88, %s93
          %s95 = smul.addr %s13, 2
          %s96 = smul.addr %s95, 128
          %s97 = scalar_lea.hbm %s0, %s96
          %s98 = sshll.u32 %s91, 4
          %s99 = int_to_ptr.vmem [resolvable:$true] %s98
          %104 = dma.hbm_to_vmem [thread:$0]  %s97, 256, %s99, %s88, 128, 128, 8
        $region20: #{tpu_custom_call.1} parent=15 // pred_fallthru
          _
      $region16: #{tpu_custom_call.1} parent=5 // pred_fallthru
        _
      %p105 = scmp.le.s32.totalorder 1, %s13
      %p106 = scmp.lt.s32.totalorder %s13, 3
      %p107 = pnand %p105, %p106
      %p108 = pneg %p107
      // Predicated region
      $region21: #{tpu_custom_call.1} parent=5 // pred_check
        _
      $region22: #{tpu_custom_call.1} parent=5 // pred_check_branch
        %110 = sbr.rel (%p107) target = $region24
      $region23: #{tpu_custom_call.1} parent=5 // pred_region
        %s111 = ssub.s32 %s13, 1
        %s112 = sand.u32 %s26, 1
        %s113 = scalar_lea.sflag [#allocation6], %s112
        %s114 = sand.u32 %s26, 1
        %s115 = smul.addr %s114, 16
        %s116 = scalar_lea.vmem [#allocation5], %s115
        // Predicated region
        $region25: #{tpu_custom_call.1} parent=23 // pred_check
          %p117 = pneg %p39
        $region26: #{tpu_custom_call.1} parent=23 // pred_check_branch
          %119 = sbr.rel (%p117) target = $region28
        $region27: #{tpu_custom_call.1} parent=23 // pred_region
          %120 = dma.done %s113, 256
        $region28: #{tpu_custom_call.1} parent=23 // pred_fallthru
          _
        %s121 = sand.u32 %s26, 1
        %s122 = scalar_lea.sflag [#allocation6], %s121
        %s123 = sand.u32 %s26, 1
        %s124 = smul.addr %s123, 16
        %s125 = scalar_lea.vmem [#allocation5], %s124
        %p126 = pneg %p39
        %p127 = pneg %p36
        %p128 = pneg %p65
        %p129 = pneg %p62
        %s130 = sand.u32 %s52, 1
        %s131 = scalar_lea.sflag [#allocation7], %s130
        %s132 = sand.u32 %s52, 1
        %s133 = smul.addr %s132, 16
        %s134 = scalar_lea.vmem [#allocation8], %s133
        %vm135 = vcmask 1042416
        %136 = vst.msk [vmem:[#allocation2] sm:$0x3] %vm135, 0.0
        %vm137 = vcmask 140288
        %138 = vst.msk [vmem:[#allocation2 + $0x8] sm:$0x3] %vm137, 0.0
        %vm139 = vcmask 1044466
        %140 = vst.msk [vmem:[#allocation2 + $0x20] sm:$0xc] %vm139, 0.0
        %vm141 = vcmask 142338
        %142 = vst.msk [vmem:[#allocation2 + $0x28] sm:$0xc] %vm141, 0.0
        %vm143 = vcmask 1048562
        %144 = vst.msk [vmem:[#allocation2] sm:$0xfc] %vm143, 0.0
        %vm145 = vcmask 1048560
        %146 = vst.msk [vmem:[#allocation2 + $0x10] sm:$0xff] %vm145, 0.0
        %147 = vst.msk [vmem:[#allocation2 + $0x20] sm:$0x3] %vm135, 0.0
        %vm148 = vcmask 146562
        %149 = vst.msk [vmem:[#allocation2 + $0x8] sm:$0xfc] %vm148, 0.0
        %vm150 = vcmask 146560
        %151 = vst.msk [vmem:[#allocation2 + $0x18] sm:$0xff] %vm150, 0.0
        %vm152 = vcmask 140416
        %153 = vst.msk [vmem:[#allocation2 + $0x28] sm:$0x3] %vm152, 0.0
        %v154 = vld [vmem:[%s116] sm:$0xff]
        %v155 = vld [vmem:[%s116 + $0x8] sm:$0xff]
        %vm158 = vcmask 1041408
        %v159 = vrot.slane %v154, 6
        %v160 = vrot.slane %v155, 6
        %v161 = vsel %vm158, %v159, %v160
        %vm165 = vcmask 130050
        %166 = vst.msk [vmem:[#allocation2 + $0x8] sm:$0xfc] %vm165, %v159
        %vm167 = vcmask 130048
        %168 = vst.msk [vmem:[#allocation2 + $0x18] sm:$0xff] %vm167, %v161
        %vm169 = vcmask 123904
        %170 = vst.msk [vmem:[#allocation2 + $0x28] sm:$0x3] %vm169, %v160
        %v171 = vld [vmem:[#allocation2] sm:$0xff]
        %v172 = vld [vmem:[#allocation2 + $0x8] sm:$0xff]
        %v173 = vld [vmem:[#allocation2 + $0x10] sm:$0xff]
        %v174 = vld [vmem:[#allocation2 + $0x18] sm:$0xff]
        %v175 = vld [vmem:[#allocation2 + $0x20] sm:$0xf]
        %v176 = vld [vmem:[#allocation2 + $0x28] sm:$0xf]
        %180 = vrot.lane.b32.xlu0 %v172, 124
        %v181 = vpop.permute.xlu0 %180
        %182 = vrot.lane.b32.xlu0 %v174, 124
        %v183 = vpop.permute.xlu0 %182
        %184 = vrot.lane.b32.xlu0 %v176, 124
        %v185 = vpop.permute.xlu0 %184
        %v189 = vadd.f32 %v171, %v181
        %v190 = vadd.f32 %v172, %v181
        %v191 = vadd.f32 %v173, %v183
        %v192 = vadd.f32 %v174, %v183
        %v193 = vadd.f32 %v175, %v185
        %v194 = vadd.f32 %v176, %v185
        %195 = vrot.lane.b32.xlu0 %v172, 126
        %v196 = vpop.permute.xlu0 %195
        %197 = vrot.lane.b32.xlu0 %v174, 126
        %v198 = vpop.permute.xlu0 %197
        %199 = vrot.lane.b32.xlu0 %v176, 126
        %v200 = vpop.permute.xlu0 %199
        %v204 = vadd.f32 %v171, %v196
        %v205 = vadd.f32 %v172, %v196
        %v206 = vadd.f32 %v173, %v198
        %v207 = vadd.f32 %v174, %v198
        %v208 = vadd.f32 %v175, %v200
        %v209 = vadd.f32 %v176, %v200
        %v210 = vmul.f32 %v204, 2.0
        %v211 = vmul.f32 %v205, 2.0
        %v212 = vmul.f32 %v206, 2.0
        %v213 = vmul.f32 %v207, 2.0
        %v214 = vmul.f32 %v208, 2.0
        %v215 = vmul.f32 %v209, 2.0
        %222 = vrot.lane.b32.xlu0 %v189, 1
        %v223 = vpop.permute.xlu0 %222
        %224 = vrot.lane.b32.xlu0 %v190, 1
        %v225 = vpop.permute.xlu0 %224
        %226 = vrot.lane.b32.xlu0 %v191, 1
        %v227 = vpop.permute.xlu0 %226
        %228 = vrot.lane.b32.xlu0 %v192, 1
        %v229 = vpop.permute.xlu0 %228
        %230 = vrot.lane.b32.xlu0 %v193, 1
        %v231 = vpop.permute.xlu0 %230
        %232 = vrot.lane.b32.xlu0 %v194, 1
        %v233 = vpop.permute.xlu0 %232
        %vm234 = vcmask 7168
        %v235 = vsel %vm234, %v223, %v225
        %v236 = vsel %vm234, %v227, %v229
        %v237 = vsel %vm234, %v231, %v233
        %v244 = vsub.f32 %v210, %v223
        %v245 = vsub.f32 %v211, %v235
        %v246 = vsub.f32 %v212, %v227
        %v247 = vsub.f32 %v213, %v236
        %v248 = vsub.f32 %v214, %v231
        %v249 = vsub.f32 %v215, %v237
        %v250 = vmul.f32 %v172, 2.0
        %v251 = vmul.f32 %v174, 2.0
        %v252 = vmul.f32 %v176, 2.0
        %256 = vrot.lane.b32.xlu0 %v250, 127
        %v257 = vpop.permute.xlu0 %256
        %258 = vrot.lane.b32.xlu0 %v251, 127
        %v259 = vpop.permute.xlu0 %258
        %260 = vrot.lane.b32.xlu0 %v252, 127
        %v261 = vpop.permute.xlu0 %260
        %v265 = vsub.f32 %v244, %v257
        %v266 = vsub.f32 %v245, %v257
        %v267 = vsub.f32 %v246, %v259
        %v268 = vsub.f32 %v247, %v259
        %v269 = vsub.f32 %v248, %v261
        %v270 = vsub.f32 %v249, %v261
        %277 = vrot.lane.b32.xlu0 %v265, 1
        %v278 = vpop.permute.xlu0 %277
        %279 = vrot.lane.b32.xlu0 %v266, 1
        %v280 = vpop.permute.xlu0 %279
        %281 = vrot.lane.b32.xlu0 %v267, 1
        %v282 = vpop.permute.xlu0 %281
        %283 = vrot.lane.b32.xlu0 %v268, 1
        %v284 = vpop.permute.xlu0 %283
        %285 = vrot.lane.b32.xlu0 %v269, 1
        %v286 = vpop.permute.xlu0 %285
        %287 = vrot.lane.b32.xlu0 %v270, 1
        %v288 = vpop.permute.xlu0 %287
        %v289 = vsel %vm234, %v278, %v280
        %v290 = vsel %vm234, %v282, %v284
        %v291 = vsel %vm234, %v286, %v288
        %295 = vst.msk [vmem:[#allocation3] sm:$0xff] %vm167, %v289
        %296 = vst.msk [vmem:[#allocation3 + $0x8] sm:$0xff] %vm167, %v290
        %vm297 = vcmask 125952
        %298 = vst.msk [vmem:[#allocation3 + $0x10] sm:$0xf] %vm297, %v291
        %v299 = vmul.f32 %v189, 2.0
        %v300 = vmul.f32 %v190, 2.0
        %v301 = vmul.f32 %v191, 2.0
        %v302 = vmul.f32 %v192, 2.0
        %v303 = vmul.f32 %v193, 2.0
        %v304 = vmul.f32 %v194, 2.0
        %v305 = vmul.f32 %v204, 6.0
        %v306 = vmul.f32 %v205, 6.0
        %v307 = vmul.f32 %v206, 6.0
        %v308 = vmul.f32 %v207, 6.0
        %v309 = vmul.f32 %v208, 6.0
        %v310 = vmul.f32 %v209, 6.0
        %317 = vrot.lane.b32.xlu0 %v305, 127
        %v318 = vpop.permute.xlu0 %317
        %319 = vrot.lane.b32.xlu0 %v306, 127
        %v320 = vpop.permute.xlu0 %319
        %321 = vrot.lane.b32.xlu0 %v307, 127
        %v322 = vpop.permute.xlu0 %321
        %323 = vrot.lane.b32.xlu0 %v308, 127
        %v324 = vpop.permute.xlu0 %323
        %325 = vrot.lane.b32.xlu0 %v309, 127
        %v326 = vpop.permute.xlu0 %325
        %327 = vrot.lane.b32.xlu0 %v310, 127
        %v328 = vpop.permute.xlu0 %327
        %vm329 = vcmask 1039360
        %v330 = vsel %vm329, %v318, %v320
        %v331 = vsel %vm329, %v322, %v324
        %v332 = vsel %vm329, %v326, %v328
        %v339 = vsub.f32 %v299, %v330
        %v340 = vsub.f32 %v300, %v320
        %v341 = vsub.f32 %v301, %v331
        %v342 = vsub.f32 %v302, %v324
        %v343 = vsub.f32 %v303, %v332
        %v344 = vsub.f32 %v304, %v328
        %v345 = vmul.f32 %v172, 8.0
        %v346 = vmul.f32 %v174, 8.0
        %v347 = vmul.f32 %v176, 8.0
        %351 = vrot.lane.b32.xlu0 %v345, 126
        %v352 = vpop.permute.xlu0 %351
        %353 = vrot.lane.b32.xlu0 %v346, 126
        %v354 = vpop.permute.xlu0 %353
        %355 = vrot.lane.b32.xlu0 %v347, 126
        %v356 = vpop.permute.xlu0 %355
        %v360 = vadd.f32 %v339, %v352
        %v361 = vadd.f32 %v340, %v352
        %v362 = vadd.f32 %v341, %v354
        %v363 = vadd.f32 %v342, %v354
        %v364 = vadd.f32 %v343, %v356
        %v365 = vadd.f32 %v344, %v356
        %372 = vrot.lane.b32.xlu0 %v360, 2
        %v373 = vpop.permute.xlu0 %372
        %374 = vrot.lane.b32.xlu0 %v361, 2
        %v375 = vpop.permute.xlu0 %374
        %376 = vrot.lane.b32.xlu0 %v362, 2
        %v377 = vpop.permute.xlu0 %376
        %378 = vrot.lane.b32.xlu0 %v363, 2
        %v379 = vpop.permute.xlu0 %378
        %380 = vrot.lane.b32.xlu0 %v364, 2
        %v381 = vpop.permute.xlu0 %380
        %382 = vrot.lane.b32.xlu0 %v365, 2
        %v383 = vpop.permute.xlu0 %382
        %vm384 = vcmask 15360
        %v385 = vsel %vm384, %v373, %v375
        %v386 = vsel %vm384, %v377, %v379
        %v387 = vsel %vm384, %v381, %v383
        %391 = vst.msk [vmem:[#allocation4] sm:$0xff] %vm167, %v385
        %392 = vst.msk [vmem:[#allocation4 + $0x8] sm:$0xff] %vm167, %v386
        %393 = vst.msk [vmem:[#allocation4 + $0x10] sm:$0xf] %vm297, %v387
        %v394 = vld [vmem:[#allocation3] sm:$0xff]
        %v395 = vld [vmem:[#allocation3 + $0x8] sm:$0xff]
        %v396 = vld [vmem:[#allocation3 + $0x4] sm:$0xff]
        %v397 = vld [vmem:[#allocation3 + $0xc] sm:$0xff]
        %v398 = vadd.f32 %v394, %v396
        %v399 = vadd.f32 %v395, %v397
        %v400 = vld [vmem:[#allocation4 + $0x1] sm:$0xff]
        %v401 = vld [vmem:[#allocation4 + $0x9] sm:$0xff]
        %v402 = vld [vmem:[#allocation4 + $0x3] sm:$0xff]
        %v403 = vld [vmem:[#allocation4 + $0xb] sm:$0xff]
        %v404 = vadd.f32 %v400, %v402
        %v405 = vadd.f32 %v401, %v403
        %v406 = vld [vmem:[#allocation3 + $0x2] sm:$0xff]
        %v407 = vld [vmem:[#allocation3 + $0xa] sm:$0xff]
        %v408 = vld [vmem:[#allocation4 + $0x2] sm:$0xff]
        %v409 = vld [vmem:[#allocation4 + $0xa] sm:$0xff]
        %v410 = vadd.f32 %v406, %v408
        %v411 = vadd.f32 %v407, %v409
        %v412 = vadd.f32 %v398, %v404
        %v413 = vadd.f32 %v399, %v405
        %v414 = vmul.f32 %v410, 2.0
        %v415 = vmul.f32 %v411, 2.0
        %v416 = vsub.f32 %v412, %v414
        %v417 = vsub.f32 %v413, %v415
        %418 = vst.msk [vmem:[%s134] sm:$0xff] %vm167, %v416
        %419 = vst.msk [vmem:[%s134 + $0x8] sm:$0xff] %vm167, %v417
        %s420 = sand.u32 %s52, 1
        %s421 = scalar_lea.sflag [#allocation7], %s420
        %s422 = sand.u32 %s52, 1
        %s423 = smul.addr %s422, 16
        %s424 = scalar_lea.vmem [#allocation8], %s423
        // Predicated region
        $region29: #{tpu_custom_call.1} parent=23 // pred_check
          %p425 = pneg %p62
        $region30: #{tpu_custom_call.1} parent=23 // pred_check_branch
          %427 = sbr.rel (%p425) target = $region32
        $region31: #{tpu_custom_call.1} parent=23 // pred_region
          %s429 = ssub.s32 256, 256
          %430 = vsyncadd %s421, %s429
          %s431 = smul.addr %s18, 2
          %s432 = smul.addr %s431, 128
          %s433 = scalar_lea.hbm %s1, %s432
          %s434 = sshll.u32 %s424, 4
          %s435 = int_to_ptr.vmem [resolvable:$true] %s434
          %440 = dma.vmem_to_hbm [thread:$0]  %s435, 256, %s433, %s421, 128, 128, 8
        $region32: #{tpu_custom_call.1} parent=23 // pred_fallthru
          _
      $region24: #{tpu_custom_call.1} parent=5 // pred_fallthru
        _
      %p441 = scmp.le.s32.totalorder 2, %s13
      // Predicated region
      $region33: #{tpu_custom_call.1} parent=5 // pred_check
        %p442 = pneg %p441
      $region34: #{tpu_custom_call.1} parent=5 // pred_check_branch
        %444 = sbr.rel (%p442) target = $region36
      $region35: #{tpu_custom_call.1} parent=5 // pred_region
        %s445 = ssub.s32 %s13, 2
        // Predicated region
        $region37: #{tpu_custom_call.1} parent=35 // pred_check
          %p446 = pneg %p68
        $region38: #{tpu_custom_call.1} parent=35 // pred_check_branch
          %448 = sbr.rel (%p446) target = $region40
        $region39: #{tpu_custom_call.1} parent=35 // pred_region
          %s449 = sand.u32 %s53, 1
          %s450 = scalar_lea.sflag [#allocation7], %s449
          %s451 = sand.u32 %s53, 1
          %s452 = smul.addr %s451, 16
          %s453 = scalar_lea.vmem [#allocation8], %s452
          %454 = dma.done %s450, 256
        $region40: #{tpu_custom_call.1} parent=35 // pred_fallthru
          _
      $region36: #{tpu_custom_call.1} parent=5 // pred_fallthru
        _
    $region6: #{tpu_custom_call.1} parent=1 // loop_footer
      %s17 = sadd.s32 1, %s13
    $region7: #{tpu_custom_call.1} parent=1 // loop_footer_branch
      %12 = sbr.rel target = $region3
    $region8: #{tpu_custom_call.1} parent=1 // loop_exit
      _
    %455 = vsyncpa [#allocation6], 1
    %s456 = scalar_lea.sflag [#allocation6], 1
    %457 = vsyncpa %s456, 1
    %458 = vsyncpa [#allocation7], 1
    %s459 = scalar_lea.sflag [#allocation7], 1
    %460 = vsyncpa %s459, 1

</llo_original>
